<compile_context>
chip_gen: v7x
topology: tpu7x:2x2x1
jax: 0.10.0
libtpu: 0.0.40
codegen_flags: <defaults>
</compile_context>

<pallas_src>
import functools

import jax
import jax.numpy as jnp
from jax.experimental import pallas as pl
from jax.experimental.pallas import tpu as pltpu

IN_DIM = 28 * 28          # 784
ENC_DIM = 32              # encoding_dim


def _round_up(x, m):
    return ((x + m - 1) // m) * m


def autoencoder_kernel(x_ref, w1_ref, b1_ref, w2_ref, b2_ref, o_ref):
    # Upcast the bf16 activation tile to f32 once in VMEM (cheap VPU cast;
    # the kernel is HBM-bound, so compute slack absorbs it).
    x = x_ref[...].astype(jnp.float32)
    # fc1: (tb, 784) @ (784, enc) + (1, enc)  — f32 accumulation on the MXU
    h = jnp.dot(x, w1_ref[...], preferred_element_type=jnp.float32) + b1_ref[...]
    h = jnp.maximum(h, 0.0)                                   # ReLU (VPU)
    # fc2: (tb, enc) @ (enc, 784) + (1, 784)
    y = jnp.dot(h, w2_ref[...], preferred_element_type=jnp.float32) + b2_ref[...]
    # Exact sigmoid: exp on the EUP, f32 divide; plenty of slack while HBM-bound.
    o_ref[...] = (1.0 / (1.0 + jnp.exp(-y))).astype(o_ref.dtype)


@functools.partial(jax.jit, static_argnames=("tile_b",))
def autoencoder_forward(x, w1, b1, w2, b2, *, tile_b=1024):
    """x: (B, 784) bf16/f32; w1: (784, enc) f32; b1: (1, enc); w2: (enc, 784); b2: (1, 784).

    Returns a (B, 784) bfloat16 array (bf16 I/O halves HBM streaming traffic).
    """
    B = x.shape[0]
    enc = w1.shape[1]

    # bf16 activation I/O (no-op if the caller already stores x in bf16).
    x = x.astype(jnp.bfloat16)

    # Batch tile: big enough to amortize the ~0.35 us per-grid-step overhead,
    # small enough that double-buffered bf16 x/out tiles fit every
    # generation's scoped-VMEM default (v5e 16 MiB).
    tb = min(tile_b, _round_up(B, 8))
    # v7x megacore: keep >= 2 grid steps when B allows it so the "parallel"
    # batch axis can be sharded across both TensorCores (no-op on v5e/v6e).
    if B >= 16 and pl.cdiv(B, tb) < 2:
        tb = _round_up(pl.cdiv(B, 2), 8)
    grid = (pl.cdiv(B, tb),)

    flops = 2 * B * IN_DIM * enc + 2 * B * enc * IN_DIM
    bytes_accessed = (
        2 * B * IN_DIM          # x in bf16
        + 2 * B * IN_DIM        # out in bf16
        + 4 * (w1.size + b1.size + w2.size + b2.size)
    )

    out = pl.pallas_call(
        autoencoder_kernel,
        out_shape=jax.ShapeDtypeStruct((B, IN_DIM), jnp.bfloat16),
        grid=grid,
        in_specs=[
            pl.BlockSpec((tb, IN_DIM), lambda i: (i, 0)),   # stream x over batch
            pl.BlockSpec(w1.shape, lambda i: (0, 0)),        # weights VMEM-resident
            pl.BlockSpec(b1.shape, lambda i: (0, 0)),
            pl.BlockSpec(w2.shape, lambda i: (0, 0)),
            pl.BlockSpec(b2.shape, lambda i: (0, 0)),
        ],
        out_specs=pl.BlockSpec((tb, IN_DIM), lambda i: (i, 0)),
        compiler_params=pltpu.CompilerParams(
            dimension_semantics=("parallel",),               # megacore on v7x
        ),
        cost_estimate=pl.CostEstimate(
            flops=flops,
            transcendentals=B * IN_DIM,
            bytes_accessed=bytes_accessed,
        ),
    )(x, w1, b1, w2, b2)

    return out


def init_params(key, encoding_dim=ENC_DIM):
    """Deterministic init mimicking nn.Linear's U(-1/sqrt(fan_in), 1/sqrt(fan_in))."""
    k1, k2, k3, k4 = jax.random.split(key, 4)
    bound1 = 1.0 / jnp.sqrt(IN_DIM)
    bound2 = 1.0 / jnp.sqrt(encoding_dim)
    # Stored as (in, out) — i.e. the transpose of PyTorch's (out, in) weight.
    w1 = jax.random.uniform(k1, (IN_DIM, encoding_dim), jnp.float32, -bound1, bound1)
    b1 = jax.random.uniform(k2, (1, encoding_dim), jnp.float32, -bound1, bound1)
    w2 = jax.random.uniform(k3, (encoding_dim, IN_DIM), jnp.float32, -bound2, bound2)
    b2 = jax.random.uniform(k4, (1, IN_DIM), jnp.float32, -bound2, bound2)
    return w1, b1, w2, b2


if __name__ == "__main__":
    key = jax.random.PRNGKey(0)
    kx, kp = jax.random.split(key)
    B = 2
    x = jax.random.uniform(kx, (B, IN_DIM), jnp.float32)  # MNIST-like [0,1) pixels
    w1, b1, w2, b2 = init_params(kp)

    # Store activations in bf16 once, outside the forward (halves HBM traffic;
    # the one-time cast is not paid per call).
    x_bf16 = x.astype(jnp.bfloat16)

    out = autoencoder_forward(x_bf16, w1, b1, w2, b2)
    out = jax.block_until_ready(out)

    # Reference on the same bf16 input the kernel consumes, computed in f32
    # with exact sigmoid — isolates kernel error to bf16 output quantization.
    xf = x_bf16.astype(jnp.float32)
    ref = jax.nn.sigmoid(jnp.maximum(xf @ w1 + b1, 0.0) @ w2 + b2)
    assert out.shape == (B, IN_DIM)
    assert out.dtype == jnp.bfloat16
    assert jnp.allclose(out.astype(jnp.float32), ref, atol=8e-3, rtol=8e-3)

    print("KERNEL_OK")
</pallas_src>

<mosaic_0001>
module attributes {stable_mosaic.version = 11 : i64} {
  func.func @autoencoder_kernel(%arg0: i32, %arg1: memref<8x784xbf16, #tpu.memory_space<vmem>>, %arg2: memref<784x32xf32, #tpu.memory_space<vmem>>, %arg3: memref<1x32xf32, #tpu.memory_space<vmem>>, %arg4: memref<32x784xf32, #tpu.memory_space<vmem>>, %arg5: memref<1x784xf32, #tpu.memory_space<vmem>>, %arg6: memref<8x784xbf16, #tpu.memory_space<vmem>>) attributes {dimension_semantics = [#tpu.dimension_semantics<parallel>], iteration_bounds = array<i64: 1>, scalar_prefetch = 0 : i64, scratch_operands = 0 : i64, tpu.core_type = #tpu.core_type<tc>, window_params = [{transform_indices = @transform_0, window_bounds = array<i64: 8, 784>}, {pipeline_mode = #tpu.pipeline_mode<synchronous>, transform_indices = @transform_1, window_bounds = array<i64: 784, 32>}, {pipeline_mode = #tpu.pipeline_mode<synchronous>, transform_indices = @transform_2, window_bounds = array<i64: 1, 32>}, {pipeline_mode = #tpu.pipeline_mode<synchronous>, transform_indices = @transform_3, window_bounds = array<i64: 32, 784>}, {pipeline_mode = #tpu.pipeline_mode<synchronous>, transform_indices = @transform_4, window_bounds = array<i64: 1, 784>}, {transform_indices = @transform_5, window_bounds = array<i64: 8, 784>}]} {
    %c0 = arith.constant 0 : index
    %c0_0 = arith.constant 0 : index
    %0 = vector.load %arg1[%c0, %c0_0] : memref<8x784xbf16, #tpu.memory_space<vmem>>, vector<8x784xbf16>
    %1 = arith.extf %0 : vector<8x784xbf16> to vector<8x784xf32>
    %c0_1 = arith.constant 0 : index
    %c0_2 = arith.constant 0 : index
    %2 = vector.load %arg2[%c0_1, %c0_2] : memref<784x32xf32, #tpu.memory_space<vmem>>, vector<784x32xf32>
    %cst = arith.constant dense<0.000000e+00> : vector<8x32xf32>
    %3 = tpu.matmul %1, %2, %cst {dimension_numbers = #tpu.dot_dimension_numbers<[1], [0], [0], [1], [0, 0, 1, 1], [], []>} : vector<8x784xf32>, vector<784x32xf32>, vector<8x32xf32> -> vector<8x32xf32>
    %c0_3 = arith.constant 0 : index
    %c0_4 = arith.constant 0 : index
    %4 = vector.load %arg3[%c0_3, %c0_4] : memref<1x32xf32, #tpu.memory_space<vmem>>, vector<1x32xf32>
    %5 = vector.broadcast %4 : vector<1x32xf32> to vector<8x32xf32>
    %6 = arith.addf %3, %5 : vector<8x32xf32>
    %cst_5 = arith.constant 0.000000e+00 : f32
    %7 = vector.broadcast %cst_5 : f32 to vector<8x32xf32>
    %8 = arith.maximumf %6, %7 : vector<8x32xf32>
    %c0_6 = arith.constant 0 : index
    %c0_7 = arith.constant 0 : index
    %9 = vector.load %arg4[%c0_6, %c0_7] : memref<32x784xf32, #tpu.memory_space<vmem>>, vector<32x784xf32>
    %cst_8 = arith.constant dense<0.000000e+00> : vector<8x784xf32>
    %10 = tpu.matmul %8, %9, %cst_8 {dimension_numbers = #tpu.dot_dimension_numbers<[1], [0], [0], [1], [0, 0, 1, 1], [], []>} : vector<8x32xf32>, vector<32x784xf32>, vector<8x784xf32> -> vector<8x784xf32>
    %c0_9 = arith.constant 0 : index
    %c0_10 = arith.constant 0 : index
    %11 = vector.load %arg5[%c0_9, %c0_10] : memref<1x784xf32, #tpu.memory_space<vmem>>, vector<1x784xf32>
    %12 = vector.broadcast %11 : vector<1x784xf32> to vector<8x784xf32>
    %13 = arith.addf %10, %12 : vector<8x784xf32>
    %cst_11 = arith.constant 0.000000e+00 : f32
    %14 = vector.broadcast %cst_11 : f32 to vector<8x784xf32>
    %15 = arith.subf %14, %13 : vector<8x784xf32>
    %16 = math.exp %15 : vector<8x784xf32>
    %cst_12 = arith.constant 1.000000e+00 : f32
    %17 = vector.broadcast %cst_12 : f32 to vector<8x784xf32>
    %18 = arith.addf %17, %16 : vector<8x784xf32>
    %cst_13 = arith.constant 1.000000e+00 : f32
    %19 = vector.broadcast %cst_13 : f32 to vector<8x784xf32>
    %20 = arith.divf %19, %18 : vector<8x784xf32>
    %21 = arith.truncf %20 : vector<8x784xf32> to vector<8x784xbf16>
    %c0_14 = arith.constant 0 : index
    %c0_15 = arith.constant 0 : index
    %22 = vector.load %arg6[%c0_14, %c0_15] : memref<8x784xbf16, #tpu.memory_space<vmem>>, vector<8x784xbf16>
    tpu.vector_store %arg6[%c0_14, %c0_15], %21 {strides = array<i32>} : memref<8x784xbf16, #tpu.memory_space<vmem>>, vector<8x784xbf16>,
    return
  }
  func.func @transform_0(%arg0: i32) -> (i32, i32) {
    %c0_i32 = arith.constant 0 : i32
    %c0_i32_0 = arith.constant 0 : i32
    return %arg0, %c0_i32 : i32, i32
  }
  func.func @transform_1(%arg0: i32) -> (i32, i32) {
    %c0_i32 = arith.constant 0 : i32
    %c0_i32_0 = arith.constant 0 : i32
    %c0_i32_1 = arith.constant 0 : i32
    return %c0_i32, %c0_i32_0 : i32, i32
  }
  func.func @transform_2(%arg0: i32) -> (i32, i32) {
    %c0_i32 = arith.constant 0 : i32
    %c0_i32_0 = arith.constant 0 : i32
    %c0_i32_1 = arith.constant 0 : i32
    return %c0_i32, %c0_i32_0 : i32, i32
  }
  func.func @transform_3(%arg0: i32) -> (i32, i32) {
    %c0_i32 = arith.constant 0 : i32
    %c0_i32_0 = arith.constant 0 : i32
    %c0_i32_1 = arith.constant 0 : i32
    return %c0_i32, %c0_i32_0 : i32, i32
  }
  func.func @transform_4(%arg0: i32) -> (i32, i32) {
    %c0_i32 = arith.constant 0 : i32
    %c0_i32_0 = arith.constant 0 : i32
    %c0_i32_1 = arith.constant 0 : i32
    return %c0_i32, %c0_i32_0 : i32, i32
  }
  func.func @transform_5(%arg0: i32) -> (i32, i32) {
    %c0_i32 = arith.constant 0 : i32
    %c0_i32_0 = arith.constant 0 : i32
    return %arg0, %c0_i32 : i32, i32
  }
}

</mosaic_0001>

<llo_original>
// kernel: autoencoder_forward.1
$region0: #{autoencoder_forward.1}
  #allocation0 [shape = 'u32[]', space=smem, size = 0x4, offset = 0x4, fixed_abs, tag = 'smem constant byte address 0x4 - core index']
  #allocation1 [shape = 'u32[144,128]{1,0:T(1,128)}', space=vmem, size = 0x12000, scoped, tag = 'internal scratch']
  %s0 = inlined_call_operand.vmem [shape: bf16[2,784], index: 0, kind: input, shape index: {}]
  %s1 = inlined_call_operand.vmem [shape: f32[784,32], index: 1, kind: input, shape index: {}]
  %s2 = inlined_call_operand.vmem [shape: f32[1,32], index: 2, kind: input, shape index: {}]
  %s3 = inlined_call_operand.vmem [shape: f32[32,784], index: 3, kind: input, shape index: {}]
  %s4 = inlined_call_operand.vmem [shape: f32[1,784], index: 4, kind: input, shape index: {}]
  %s5 = inlined_call_operand.hbm [shape: bf16[2,784], index: 5, kind: output, shape index: {}]
  %s6 = sld [smem:[#allocation0]]
  $region30: #{autoencoder_forward.1} parent=0
    _
  %s8 = ssub.s32 1, %s6
  %s9 = scalar_select 0, %s8, %s6
  $region1: #{autoencoder_forward.1} parent=0
    #allocation2 [shape = 'u8[14336]{0}', space=vmem, size = 0x3800, scoped, tag = 'output window, operand 0, single buffered']
    #allocation3 [shape = 's32[1]{0}', space=sflag, size = 0x4, scoped, tag = 'scoped memory for autoencoder_forward.1']
    %10 = vsyncpa [#allocation3], 0
    // Predicated region
    $region2: #{autoencoder_forward.1} parent=1 // pred_check
      _
    $region3: #{autoencoder_forward.1} parent=1 // pred_check_branch
      %12 = sbr.rel (0) target = $region5
    $region4: #{autoencoder_forward.1} parent=1 // pred_region
      _
    $region5: #{autoencoder_forward.1} parent=1 // pred_fallthru
      _
    // Predicated region
    $region6: #{autoencoder_forward.1} parent=1 // pred_check
      _
    $region7: #{autoencoder_forward.1} parent=1 // pred_check_branch
      %14 = sbr.rel (0) target = $region9
    $region8: #{autoencoder_forward.1} parent=1 // pred_region
      _
    $region9: #{autoencoder_forward.1} parent=1 // pred_fallthru
      _
    // Predicated region
    $region10: #{autoencoder_forward.1} parent=1 // pred_check
      _
    $region11: #{autoencoder_forward.1} parent=1 // pred_check_branch
      %16 = sbr.rel (0) target = $region13
    $region12: #{autoencoder_forward.1} parent=1 // pred_region
      _
    $region13: #{autoencoder_forward.1} parent=1 // pred_fallthru
      _
    // Predicated region
    $region14: #{autoencoder_forward.1} parent=1 // pred_check
      _
    $region15: #{autoencoder_forward.1} parent=1 // pred_check_branch
      %18 = sbr.rel (0) target = $region17
    $region16: #{autoencoder_forward.1} parent=1 // pred_region
      _
    $region17: #{autoencoder_forward.1} parent=1 // pred_fallthru
      _
    // Predicated region
    $region18: #{autoencoder_forward.1} parent=1 // pred_check
      _
    $region19: #{autoencoder_forward.1} parent=1 // pred_check_branch
      %20 = sbr.rel (0) target = $region21
    $region20: #{autoencoder_forward.1} parent=1 // pred_region
      _
    $region21: #{autoencoder_forward.1} parent=1 // pred_fallthru
      _
    %v21 = vld [vmem:[%s0] sm:$0x7f]
    %v22 = vld [vmem:[%s0 + $0x7] sm:$0x7f]
    %v23 = vld [vmem:[%s0 + $0xe] sm:$0x7f]
    %v24 = vld [vmem:[%s0 + $0x15] sm:$0x7f]
    %v25 = vunpack.c.l.bf16 %v21
    %v26 = vunpack.c.h.bf16 %v21
    %v27 = vunpack.c.l.bf16 %v22
    %v28 = vunpack.c.h.bf16 %v22
    %v29 = vunpack.c.l.bf16 %v23
    %v30 = vunpack.c.h.bf16 %v23
    %v31 = vunpack.c.l.bf16 %v24
    %v32 = vunpack.c.h.bf16 %v24
    %v33 = vld [vmem:[%s1] sm:$0xff]
    %v34 = vld [vmem:[%s1 + $0x8] sm:$0xff]
    %v35 = vld [vmem:[%s1 + $0x10] sm:$0xff]
    %v36 = vld [vmem:[%s1 + $0x18] sm:$0xff]
    %v37 = vld [vmem:[%s1 + $0x20] sm:$0xff]
    %v38 = vld [vmem:[%s1 + $0x28] sm:$0xff]
    %v39 = vld [vmem:[%s1 + $0x30] sm:$0xff]
    %v40 = vld [vmem:[%s1 + $0x38] sm:$0xff]
    %v41 = vld [vmem:[%s1 + $0x40] sm:$0xff]
    %v42 = vld [vmem:[%s1 + $0x48] sm:$0xff]
    %v43 = vld [vmem:[%s1 + $0x50] sm:$0xff]
    %v44 = vld [vmem:[%s1 + $0x58] sm:$0xff]
    %v45 = vld [vmem:[%s1 + $0x60] sm:$0xff]
    %v46 = vld [vmem:[%s1 + $0x68] sm:$0xff]
    %v47 = vld [vmem:[%s1 + $0x70] sm:$0xff]
    %v48 = vld [vmem:[%s1 + $0x78] sm:$0xff]
    %v49 = vld [vmem:[%s1 + $0x80] sm:$0xff]
    %v50 = vld [vmem:[%s1 + $0x88] sm:$0xff]
    %v51 = vld [vmem:[%s1 + $0x90] sm:$0xff]
    %v52 = vld [vmem:[%s1 + $0x98] sm:$0xff]
    %v53 = vld [vmem:[%s1 + $0xa0] sm:$0xff]
    %v54 = vld [vmem:[%s1 + $0xa8] sm:$0xff]
    %v55 = vld [vmem:[%s1 + $0xb0] sm:$0xff]
    %v56 = vld [vmem:[%s1 + $0xb8] sm:$0xff]
    %v57 = vld [vmem:[%s1 + $0xc0] sm:$0xff]
    %v58 = vld [vmem:[%s1 + $0xc8] sm:$0xff]
    %v59 = vld [vmem:[%s1 + $0xd0] sm:$0xff]
    %v60 = vld [vmem:[%s1 + $0xd8] sm:$0xff]
    %v61 = vld [vmem:[%s1 + $0xe0] sm:$0xff]
    %v62 = vld [vmem:[%s1 + $0xe8] sm:$0xff]
    %v63 = vld [vmem:[%s1 + $0xf0] sm:$0xff]
    %v64 = vld [vmem:[%s1 + $0xf8] sm:$0xff]
    %v65 = vld [vmem:[%s1 + $0x100] sm:$0xff]
    %v66 = vld [vmem:[%s1 + $0x108] sm:$0xff]
    %v67 = vld [vmem:[%s1 + $0x110] sm:$0xff]
    %v68 = vld [vmem:[%s1 + $0x118] sm:$0xff]
    %v69 = vld [vmem:[%s1 + $0x120] sm:$0xff]
    %v70 = vld [vmem:[%s1 + $0x128] sm:$0xff]
    %v71 = vld [vmem:[%s1 + $0x130] sm:$0xff]
    %v72 = vld [vmem:[%s1 + $0x138] sm:$0xff]
    %v73 = vld [vmem:[%s1 + $0x140] sm:$0xff]
    %v74 = vld [vmem:[%s1 + $0x148] sm:$0xff]
    %v75 = vld [vmem:[%s1 + $0x150] sm:$0xff]
    %v76 = vld [vmem:[%s1 + $0x158] sm:$0xff]
    %v77 = vld [vmem:[%s1 + $0x160] sm:$0xff]
    %v78 = vld [vmem:[%s1 + $0x168] sm:$0xff]
    %v79 = vld [vmem:[%s1 + $0x170] sm:$0xff]
    %v80 = vld [vmem:[%s1 + $0x178] sm:$0xff]
    %v81 = vld [vmem:[%s1 + $0x180] sm:$0xff]
    %v82 = vld [vmem:[%s1 + $0x188] sm:$0xff]
    %v83 = vld [vmem:[%s1 + $0x190] sm:$0xff]
    %v84 = vld [vmem:[%s1 + $0x198] sm:$0xff]
    %v85 = vld [vmem:[%s1 + $0x1a0] sm:$0xff]
    %v86 = vld [vmem:[%s1 + $0x1a8] sm:$0xff]
    %v87 = vld [vmem:[%s1 + $0x1b0] sm:$0xff]
    %v88 = vld [vmem:[%s1 + $0x1b8] sm:$0xff]
    %v89 = vld [vmem:[%s1 + $0x1c0] sm:$0xff]
    %v90 = vld [vmem:[%s1 + $0x1c8] sm:$0xff]
    %v91 = vld [vmem:[%s1 + $0x1d0] sm:$0xff]
    %v92 = vld [vmem:[%s1 + $0x1d8] sm:$0xff]
    %v93 = vld [vmem:[%s1 + $0x1e0] sm:$0xff]
    %v94 = vld [vmem:[%s1 + $0x1e8] sm:$0xff]
    %v95 = vld [vmem:[%s1 + $0x1f0] sm:$0xff]
    %v96 = vld [vmem:[%s1 + $0x1f8] sm:$0xff]
    %v97 = vld [vmem:[%s1 + $0x200] sm:$0xff]
    %v98 = vld [vmem:[%s1 + $0x208] sm:$0xff]
    %v99 = vld [vmem:[%s1 + $0x210] sm:$0xff]
    %v100 = vld [vmem:[%s1 + $0x218] sm:$0xff]
    %v101 = vld [vmem:[%s1 + $0x220] sm:$0xff]
    %v102 = vld [vmem:[%s1 + $0x228] sm:$0xff]
    %v103 = vld [vmem:[%s1 + $0x230] sm:$0xff]
    %v104 = vld [vmem:[%s1 + $0x238] sm:$0xff]
    %v105 = vld [vmem:[%s1 + $0x240] sm:$0xff]
    %v106 = vld [vmem:[%s1 + $0x248] sm:$0xff]
    %v107 = vld [vmem:[%s1 + $0x250] sm:$0xff]
    %v108 = vld [vmem:[%s1 + $0x258] sm:$0xff]
    %v109 = vld [vmem:[%s1 + $0x260] sm:$0xff]
    %v110 = vld [vmem:[%s1 + $0x268] sm:$0xff]
    %v111 = vld [vmem:[%s1 + $0x270] sm:$0xff]
    %v112 = vld [vmem:[%s1 + $0x278] sm:$0xff]
    %v113 = vld [vmem:[%s1 + $0x280] sm:$0xff]
    %v114 = vld [vmem:[%s1 + $0x288] sm:$0xff]
    %v115 = vld [vmem:[%s1 + $0x290] sm:$0xff]
    %v116 = vld [vmem:[%s1 + $0x298] sm:$0xff]
    %v117 = vld [vmem:[%s1 + $0x2a0] sm:$0xff]
    %v118 = vld [vmem:[%s1 + $0x2a8] sm:$0xff]
    %v119 = vld [vmem:[%s1 + $0x2b0] sm:$0xff]
    %v120 = vld [vmem:[%s1 + $0x2b8] sm:$0xff]
    %v121 = vld [vmem:[%s1 + $0x2c0] sm:$0xff]
    %v122 = vld [vmem:[%s1 + $0x2c8] sm:$0xff]
    %v123 = vld [vmem:[%s1 + $0x2d0] sm:$0xff]
    %v124 = vld [vmem:[%s1 + $0x2d8] sm:$0xff]
    %v125 = vld [vmem:[%s1 + $0x2e0] sm:$0xff]
    %v126 = vld [vmem:[%s1 + $0x2e8] sm:$0xff]
    %v127 = vld [vmem:[%s1 + $0x2f0] sm:$0xff]
    %v128 = vld [vmem:[%s1 + $0x2f8] sm:$0xff]
    %v129 = vld [vmem:[%s1 + $0x300] sm:$0xff]
    %v130 = vld [vmem:[%s1 + $0x308] sm:$0xff]
    %v131 = vld [vmem:[%s2] sm:$0x1]
    %v133 = vlaneseq
    %v134 = vshrl.u32 %v133, 7
    %v135 = vsub.s32 0, %v134
    %v136 = vrot.slane %v131, %v135
    %v146 = vcombine.low %v25, %v27
    %v147 = vcombine.high %v25, %v27
    %v148 = vcombine.low %v29, %v31
    %v149 = vcombine.high %v29, %v31
    %v151 = vunpack.c.l.s4 1983009808
    %v152 = vunpack.c.0.s8 %v151
    %v153 = vlaneseq
    %v154 = vshrl.u32 %v153, 7
    %v155 = vsub.s32 %v152, %v154
    %v156 = vrot.slane %v146, %v155
    %v158 = vunpack.c.l.s4 1983009808
    %v159 = vunpack.c.0.s8 %v158
    %v160 = vlaneseq
    %v161 = vshrl.u32 %v160, 7
    %v162 = vsub.s32 %v159, %v161
    %v163 = vrot.slane %v147, %v162
    %v165 = vunpack.c.l.s4 1983009808
    %v166 = vunpack.c.0.s8 %v165
    %v167 = vlaneseq
    %v168 = vshrl.u32 %v167, 7
    %v169 = vsub.s32 %v166, %v168
    %v170 = vrot.slane %v148, %v169
    %v172 = vunpack.c.l.s4 1983009808
    %v173 = vunpack.c.0.s8 %v172
    %v174 = vlaneseq
    %v175 = vshrl.u32 %v174, 7
    %v176 = vsub.s32 %v173, %v175
    %v177 = vrot.slane %v149, %v176
    %v178 = vcombine.low %v156, %v170
    %v179 = vcombine.high %v156, %v170
    %v180 = vcombine.low %v163, %v177
    %v181 = vcombine.high %v163, %v177
    %v182 = vcombine.low %v26, %v28
    %v183 = vcombine.high %v26, %v28
    %v184 = vcombine.low %v30, %v32
    %v185 = vcombine.high %v30, %v32
    %v187 = vunpack.c.l.s4 1983009808
    %v188 = vunpack.c.0.s8 %v187
    %v189 = vlaneseq
    %v190 = vshrl.u32 %v189, 7
    %v191 = vsub.s32 %v188, %v190
    %v192 = vrot.slane %v182, %v191
    %v194 = vunpack.c.l.s4 1983009808
    %v195 = vunpack.c.0.s8 %v194
    %v196 = vlaneseq
    %v197 = vshrl.u32 %v196, 7
    %v198 = vsub.s32 %v195, %v197
    %v199 = vrot.slane %v183, %v198
    %v201 = vunpack.c.l.s4 1983009808
    %v202 = vunpack.c.0.s8 %v201
    %v203 = vlaneseq
    %v204 = vshrl.u32 %v203, 7
    %v205 = vsub.s32 %v202, %v204
    %v206 = vrot.slane %v184, %v205
    %v208 = vunpack.c.l.s4 1983009808
    %v209 = vunpack.c.0.s8 %v208
    %v210 = vlaneseq
    %v211 = vshrl.u32 %v210, 7
    %v212 = vsub.s32 %v209, %v211
    %v213 = vrot.slane %v185, %v212
    %v214 = vcombine.low %v192, %v206
    %v215 = vcombine.high %v192, %v206
    %v216 = vcombine.low %v199, %v213
    %vm223 = vcmask 130048
    %v224 = vsel %vm223, %v216, 0
    %226 = vmatprep.subr.mxu0 0.0
    %227 = vmatpush1.msra.mxu0 %v33
    %228 = vmatprep.subr.mxu0 0.0
    %229 = vmatpush1.msra.mxu0 %v34
    %230 = vmatprep.subr.mxu0 0.0
    %231 = vmatpush1.msra.mxu0 %v35
    %232 = vmatprep.subr.mxu0 0.0
    %233 = vmatpush1.msra.mxu0 %v36
    %234 = vmatprep.subr.mxu0 0.0
    %235 = vmatpush1.msra.mxu0 %v37
    %236 = vmatprep.subr.mxu0 0.0
    %237 = vmatpush1.msra.mxu0 %v38
    %238 = vmatprep.subr.mxu0 0.0
    %239 = vmatpush1.msra.mxu0 %v39
    %240 = vmatprep.subr.mxu0 0.0
    %241 = vmatpush1.msra.mxu0 %v40
    %242 = vmatprep.subr.mxu0 0.0
    %243 = vmatpush1.msra.mxu0 %v41
    %244 = vmatprep.subr.mxu0 0.0
    %245 = vmatpush1.msra.mxu0 %v42
    %246 = vmatprep.subr.mxu0 0.0
    %247 = vmatpush1.msra.mxu0 %v43
    %248 = vmatprep.subr.mxu0 0.0
    %249 = vmatpush1.msra.mxu0 %v44
    %250 = vmatprep.subr.mxu0 0.0
    %251 = vmatpush1.msra.mxu0 %v45
    %252 = vmatprep.subr.mxu0 0.0
    %253 = vmatpush1.msra.mxu0 %v46
    %254 = vmatprep.subr.mxu0 0.0
    %255 = vmatpush1.msra.mxu0 %v47
    %256 = vmatprep.subr.mxu0 0.0
    %257 = vmatpush1.msra.mxu0 %v48
    %258 = vmatprep.subr.mxu0 0.0
    %259 = vmatpush1.msra.mxu0 %v49
    %260 = vmatprep.subr.mxu0 0.0
    %261 = vmatpush1.msra.mxu0 %v50
    %262 = vmatprep.subr.mxu0 0.0
    %263 = vmatpush1.msra.mxu0 %v51
    %264 = vmatprep.subr.mxu0 0.0
    %265 = vmatpush1.msra.mxu0 %v52
    %266 = vmatprep.subr.mxu0 0.0
    %267 = vmatpush1.msra.mxu0 %v53
    %268 = vmatprep.subr.mxu0 0.0
    %269 = vmatpush1.msra.mxu0 %v54
    %270 = vmatprep.subr.mxu0 0.0
    %271 = vmatpush1.msra.mxu0 %v55
    %272 = vmatprep.subr.mxu0 0.0
    %273 = vmatpush1.msra.mxu0 %v56
    %274 = vmatprep.subr.mxu0 0.0
    %275 = vmatpush1.msra.mxu0 %v57
    %276 = vmatprep.subr.mxu0 0.0
    %277 = vmatpush1.msra.mxu0 %v58
    %278 = vmatprep.subr.mxu0 0.0
    %279 = vmatpush1.msra.mxu0 %v59
    %280 = vmatprep.subr.mxu0 0.0
    %281 = vmatpush1.msra.mxu0 %v60
    %282 = vmatprep.subr.mxu0 0.0
    %283 = vmatpush1.msra.mxu0 %v61
    %284 = vmatprep.subr.mxu0 0.0
    %285 = vmatpush1.msra.mxu0 %v62
    %286 = vmatprep.subr.mxu0 0.0
    %287 = vmatpush1.msra.mxu0 %v63
    %288 = vmatprep.subr.mxu0 0.0
    %289 = vmatpush1.msra.mxu0 %v64
    %290 = vmatprep.mubr.f32.mxu0 %v179
    %291 = vmatmul.mubr.f32.gmra.mrb[0].mxu0 %v178
    %v292 = vpop.f32.mrb[0].mxu0
    %v293 = vadd.f32 %v136, %v292
    %v294 = vpop.f32.mrb[0].mxu0
    %295 = vdwg.mxu0
    %296 = vmatprep.subr.mxu0 0.0
    %297 = vmatpush1.msra.mxu0 %v65
    %298 = vmatprep.subr.mxu0 0.0
    %299 = vmatpush1.msra.mxu0 %v66
    %300 = vmatprep.subr.mxu0 0.0
    %301 = vmatpush1.msra.mxu0 %v67
    %302 = vmatprep.subr.mxu0 0.0
    %303 = vmatpush1.msra.mxu0 %v68
    %304 = vmatprep.subr.mxu0 0.0
    %305 = vmatpush1.msra.mxu0 %v69
    %306 = vmatprep.subr.mxu0 0.0
    %307 = vmatpush1.msra.mxu0 %v70
    %308 = vmatprep.subr.mxu0 0.0
    %309 = vmatpush1.msra.mxu0 %v71
    %310 = vmatprep.subr.mxu0 0.0
    %311 = vmatpush1.msra.mxu0 %v72
    %312 = vmatprep.subr.mxu0 0.0
    %313 = vmatpush1.msra.mxu0 %v73
    %314 = vmatprep.subr.mxu0 0.0
    %315 = vmatpush1.msra.mxu0 %v74
    %316 = vmatprep.subr.mxu0 0.0
    %317 = vmatpush1.msra.mxu0 %v75
    %318 = vmatprep.subr.mxu0 0.0
    %319 = vmatpush1.msra.mxu0 %v76
    %320 = vmatprep.subr.mxu0 0.0
    %321 = vmatpush1.msra.mxu0 %v77
    %322 = vmatprep.subr.mxu0 0.0
    %323 = vmatpush1.msra.mxu0 %v78
    %324 = vmatprep.subr.mxu0 0.0
    %325 = vmatpush1.msra.mxu0 %v79
    %326 = vmatprep.subr.mxu0 0.0
    %327 = vmatpush1.msra.mxu0 %v80
    %328 = vmatprep.subr.mxu0 0.0
    %329 = vmatpush1.msra.mxu0 %v81
    %330 = vmatprep.subr.mxu0 0.0
    %331 = vmatpush1.msra.mxu0 %v82
    %332 = vmatprep.subr.mxu0 0.0
    %333 = vmatpush1.msra.mxu0 %v83
    %334 = vmatprep.subr.mxu0 0.0
    %335 = vmatpush1.msra.mxu0 %v84
    %336 = vmatprep.subr.mxu0 0.0
    %337 = vmatpush1.msra.mxu0 %v85
    %338 = vmatprep.subr.mxu0 0.0
    %339 = vmatpush1.msra.mxu0 %v86
    %340 = vmatprep.subr.mxu0 0.0
    %341 = vmatpush1.msra.mxu0 %v87
    %342 = vmatprep.subr.mxu0 0.0
    %343 = vmatpush1.msra.mxu0 %v88
    %344 = vmatprep.subr.mxu0 0.0
    %345 = vmatpush1.msra.mxu0 %v89
    %346 = vmatprep.subr.mxu0 0.0
    %347 = vmatpush1.msra.mxu0 %v90
    %348 = vmatprep.subr.mxu0 0.0
    %349 = vmatpush1.msra.mxu0 %v91
    %350 = vmatprep.subr.mxu0 0.0
    %351 = vmatpush1.msra.mxu0 %v92
    %352 = vmatprep.subr.mxu0 0.0
    %353 = vmatpush1.msra.mxu0 %v93
    %354 = vmatprep.subr.mxu0 0.0
    %355 = vmatpush1.msra.mxu0 %v94
    %356 = vmatprep.subr.mxu0 0.0
    %357 = vmatpush1.msra.mxu0 %v95
    %358 = vmatprep.subr.mxu0 0.0
    %359 = vmatpush1.msra.mxu0 %v96
    %360 = vmatprep.mubr.f32.mxu0 %v181
    %361 = vmatmul.mubr.f32.gmra.mrb[0].mxu0 %v180
    %v362 = vpop.f32.mrb[0].mxu0
    %v363 = vadd.f32 %v293, %v362
    %v364 = vpop.f32.mrb[0].mxu0
    %365 = vdwg.mxu0
    %366 = vmatprep.subr.mxu0 0.0
    %367 = vmatpush1.msra.mxu0 %v97
    %368 = vmatprep.subr.mxu0 0.0
    %369 = vmatpush1.msra.mxu0 %v98
    %370 = vmatprep.subr.mxu0 0.0
    %371 = vmatpush1.msra.mxu0 %v99
    %372 = vmatprep.subr.mxu0 0.0
    %373 = vmatpush1.msra.mxu0 %v100
    %374 = vmatprep.subr.mxu0 0.0
    %375 = vmatpush1.msra.mxu0 %v101
    %376 = vmatprep.subr.mxu0 0.0
    %377 = vmatpush1.msra.mxu0 %v102
    %378 = vmatprep.subr.mxu0 0.0
    %379 = vmatpush1.msra.mxu0 %v103
    %380 = vmatprep.subr.mxu0 0.0
    %381 = vmatpush1.msra.mxu0 %v104
    %382 = vmatprep.subr.mxu0 0.0
    %383 = vmatpush1.msra.mxu0 %v105
    %384 = vmatprep.subr.mxu0 0.0
    %385 = vmatpush1.msra.mxu0 %v106
    %386 = vmatprep.subr.mxu0 0.0
    %387 = vmatpush1.msra.mxu0 %v107
    %388 = vmatprep.subr.mxu0 0.0
    %389 = vmatpush1.msra.mxu0 %v108
    %390 = vmatprep.subr.mxu0 0.0
    %391 = vmatpush1.msra.mxu0 %v109
    %392 = vmatprep.subr.mxu0 0.0
    %393 = vmatpush1.msra.mxu0 %v110
    %394 = vmatprep.subr.mxu0 0.0
    %395 = vmatpush1.msra.mxu0 %v111
    %396 = vmatprep.subr.mxu0 0.0
    %397 = vmatpush1.msra.mxu0 %v112
    %398 = vmatprep.subr.mxu0 0.0
    %399 = vmatpush1.msra.mxu0 %v113
    %400 = vmatprep.subr.mxu0 0.0
    %401 = vmatpush1.msra.mxu0 %v114
    %402 = vmatprep.subr.mxu0 0.0
    %403 = vmatpush1.msra.mxu0 %v115
    %404 = vmatprep.subr.mxu0 0.0
    %405 = vmatpush1.msra.mxu0 %v116
    %406 = vmatprep.subr.mxu0 0.0
    %407 = vmatpush1.msra.mxu0 %v117
    %408 = vmatprep.subr.mxu0 0.0
    %409 = vmatpush1.msra.mxu0 %v118
    %410 = vmatprep.subr.mxu0 0.0
    %411 = vmatpush1.msra.mxu0 %v119
    %412 = vmatprep.subr.mxu0 0.0
    %413 = vmatpush1.msra.mxu0 %v120
    %414 = vmatprep.subr.mxu0 0.0
    %415 = vmatpush1.msra.mxu0 %v121
    %416 = vmatprep.subr.mxu0 0.0
    %417 = vmatpush1.msra.mxu0 %v122
    %418 = vmatprep.subr.mxu0 0.0
    %419 = vmatpush1.msra.mxu0 %v123
    %420 = vmatprep.subr.mxu0 0.0
    %421 = vmatpush1.msra.mxu0 %v124
    %422 = vmatprep.subr.mxu0 0.0
    %423 = vmatpush1.msra.mxu0 %v125
    %424 = vmatprep.subr.mxu0 0.0
    %425 = vmatpush1.msra.mxu0 %v126
    %426 = vmatprep.subr.mxu0 0.0
    %427 = vmatpush1.msra.mxu0 %v127
    %428 = vmatprep.subr.mxu0 0.0
    %429 = vmatpush1.msra.mxu0 %v128
    %430 = vmatprep.mubr.f32.mxu0 %v215
    %431 = vmatmul.mubr.f32.gmra.mrb[0].mxu0 %v214
    %v432 = vpop.f32.mrb[0].mxu0
    %v433 = vadd.f32 %v363, %v432
    %v434 = vpop.f32.mrb[0].mxu0
    %435 = vdwg.mxu0
    %436 = vmatprep.subr.mxu0 0.0
    %437 = vmatpush1.msra.mxu0 %v129
    %438 = vmatprep.subr.mxu0 0.0
    %439 = vmatpush1.msra.mxu0 %v130
    %440 = vmatprep.subr.mxu0 0.0
    %441 = vmatpush1.msra.mxu0 0.0
    %442 = vmatprep.subr.mxu0 0.0
    %443 = vmatpush1.msra.mxu0 0.0
    %444 = vmatprep.subr.mxu0 0.0
    %445 = vmatpush1.msra.mxu0 0.0
    %446 = vmatprep.subr.mxu0 0.0
    %447 = vmatpush1.msra.mxu0 0.0
    %448 = vmatprep.subr.mxu0 0.0
    %449 = vmatpush1.msra.mxu0 0.0
    %450 = vmatprep.subr.mxu0 0.0
    %451 = vmatpush1.msra.mxu0 0.0
    %452 = vmatprep.subr.mxu0 0.0
    %453 = vmatpush1.msra.mxu0 0.0
    %454 = vmatprep.subr.mxu0 0.0
    %455 = vmatpush1.msra.mxu0 0.0
    %456 = vmatprep.subr.mxu0 0.0
    %457 = vmatpush1.msra.mxu0 0.0
    %458 = vmatprep.subr.mxu0 0.0
    %459 = vmatpush1.msra.mxu0 0.0
    %460 = vmatprep.subr.mxu0 0.0
    %461 = vmatpush1.msra.mxu0 0.0
    %462 = vmatprep.subr.mxu0 0.0
    %463 = vmatpush1.msra.mxu0 0.0
    %464 = vmatprep.subr.mxu0 0.0
    %465 = vmatpush1.msra.mxu0 0.0
    %466 = vmatprep.subr.mxu0 0.0
    %467 = vmatpush1.msra.mxu0 0.0
    %468 = vmatprep.subr.mxu0 0.0
    %469 = vmatpush1.msra.mxu0 0.0
    %470 = vmatprep.subr.mxu0 0.0
    %471 = vmatpush1.msra.mxu0 0.0
    %472 = vmatprep.subr.mxu0 0.0
    %473 = vmatpush1.msra.mxu0 0.0
    %474 = vmatprep.subr.mxu0 0.0
    %475 = vmatpush1.msra.mxu0 0.0
    %476 = vmatprep.subr.mxu0 0.0
    %477 = vmatpush1.msra.mxu0 0.0
    %478 = vmatprep.subr.mxu0 0.0
    %479 = vmatpush1.msra.mxu0 0.0
    %480 = vmatprep.subr.mxu0 0.0
    %481 = vmatpush1.msra.mxu0 0.0
    %482 = vmatprep.subr.mxu0 0.0
    %483 = vmatpush1.msra.mxu0 0.0
    %484 = vmatprep.subr.mxu0 0.0
    %485 = vmatpush1.msra.mxu0 0.0
    %486 = vmatprep.subr.mxu0 0.0
    %487 = vmatpush1.msra.mxu0 0.0
    %488 = vmatprep.subr.mxu0 0.0
    %489 = vmatpush1.msra.mxu0 0.0
    %490 = vmatprep.subr.mxu0 0.0
    %491 = vmatpush1.msra.mxu0 0.0
    %492 = vmatprep.subr.mxu0 0.0
    %493 = vmatpush1.msra.mxu0 0.0
    %494 = vmatprep.subr.mxu0 0.0
    %495 = vmatpush1.msra.mxu0 0.0
    %496 = vmatprep.subr.mxu0 0.0
    %497 = vmatpush1.msra.mxu0 0.0
    %498 = vmatprep.subr.mxu0 0.0
    %499 = vmatpush1.msra.mxu0 0.0
    %500 = vmatprep.mubr.f32.mxu0 0.0
    %501 = vmatmul.mubr.f32.gmra.mrb[0].mxu0 %v224
    %v502 = vpop.f32.mrb[0].mxu0
    %v503 = vadd.f32 %v433, %v502
    %v504 = vpop.f32.mrb[0].mxu0
    %505 = vdwg.mxu0
    %v506 = vmax.f32 %v503, 0.0
    %v507 = vld [vmem:[%s3] sm:$0xff]
    %v508 = vld [vmem:[%s3 + $0x8] sm:$0xff]
    %v509 = vld [vmem:[%s3 + $0x10] sm:$0xff]
    %v510 = vld [vmem:[%s3 + $0x18] sm:$0xff]
    %v511 = vld [vmem:[%s3 + $0x20] sm:$0xff]
    %v512 = vld [vmem:[%s3 + $0x28] sm:$0xff]
    %v513 = vld [vmem:[%s3 + $0x30] sm:$0xff]
    %v514 = vld [vmem:[%s3 + $0x38] sm:$0xff]
    %v515 = vld [vmem:[%s3 + $0x40] sm:$0xff]
    %v516 = vld [vmem:[%s3 + $0x48] sm:$0xff]
    %v517 = vld [vmem:[%s3 + $0x50] sm:$0xff]
    %v518 = vld [vmem:[%s3 + $0x58] sm:$0xff]
    %v519 = vld [vmem:[%s3 + $0x60] sm:$0xff]
    %v520 = vld [vmem:[%s3 + $0x68] sm:$0xff]
    %v521 = vld [vmem:[%s3 + $0x70] sm:$0xff]
    %v522 = vld [vmem:[%s3 + $0x78] sm:$0xff]
    %v523 = vld [vmem:[%s3 + $0x80] sm:$0xff]
    %v524 = vld [vmem:[%s3 + $0x88] sm:$0xff]
    %v525 = vld [vmem:[%s3 + $0x90] sm:$0xff]
    %v526 = vld [vmem:[%s3 + $0x98] sm:$0xff]
    %v527 = vld [vmem:[%s3 + $0xa0] sm:$0xff]
    %v528 = vld [vmem:[%s3 + $0xa8] sm:$0xff]
    %v529 = vld [vmem:[%s3 + $0xb0] sm:$0xff]
    %v530 = vld [vmem:[%s3 + $0xb8] sm:$0xff]
    %v531 = vld [vmem:[%s3 + $0xc0] sm:$0xff]
    %v532 = vld [vmem:[%s3 + $0xc8] sm:$0xff]
    %v533 = vld [vmem:[%s3 + $0xd0] sm:$0xff]
    %v534 = vld [vmem:[%s3 + $0xd8] sm:$0xff]
    %v535 = vld [vmem:[%s4] sm:$0x7f]
    %v537 = vlaneseq
    %v538 = vshrl.u32 %v537, 7
    %v539 = vsub.s32 0, %v538
    %v540 = vrot.slane %v535, %v539
    %v541 = vlaneseq
    %v542 = vshrl.u32 %v541, 7
    %v543 = vsub.s32 1, %v542
    %v544 = vrot.slane %v535, %v543
    %v545 = vlaneseq
    %v546 = vshrl.u32 %v545, 7
    %v547 = vsub.s32 2, %v546
    %v548 = vrot.slane %v535, %v547
    %v549 = vlaneseq
    %v550 = vshrl.u32 %v549, 7
    %v551 = vsub.s32 3, %v550
    %v552 = vrot.slane %v535, %v551
    %v553 = vlaneseq
    %v554 = vshrl.u32 %v553, 7
    %v555 = vsub.s32 4, %v554
    %v556 = vrot.slane %v535, %v555
    %v557 = vlaneseq
    %v558 = vshrl.u32 %v557, 7
    %v559 = vsub.s32 5, %v558
    %v560 = vrot.slane %v535, %v559
    %v561 = vlaneseq
    %v562 = vshrl.u32 %v561, 7
    %v563 = vsub.s32 6, %v562
    %v564 = vrot.slane %v535, %v563
    %vm572 = vcmask 261120
    %v574 = vsel %vm572, %v506, 0
    %576 = vmatprep.subr.mxu0 %v508
    %577 = vmatpush1.msra.mxu0 %v507
    %578 = vmatprep.subr.mxu0 %v515
    %579 = vmatpush1.msra.mxu0 %v514
    %580 = vmatprep.subr.mxu0 %v522
    %581 = vmatpush1.msra.mxu0 %v521
    %582 = vmatprep.subr.mxu0 %v529
    %583 = vmatpush1.msra.mxu0 %v528
    %584 = vmatprep.subr.mxu0 0.0
    %585 = vmatpush1.msra.mxu0 0.0
    %586 = vmatprep.subr.mxu0 0.0
    %587 = vmatpush1.msra.mxu0 0.0
    %588 = vmatprep.subr.mxu0 0.0
    %589 = vmatpush1.msra.mxu0 0.0
    %590 = vmatprep.subr.mxu0 0.0
    %591 = vmatpush1.msra.mxu0 0.0
    %592 = vmatprep.subr.mxu0 0.0
    %593 = vmatpush1.msra.mxu0 0.0
    %594 = vmatprep.subr.mxu0 0.0
    %595 = vmatpush1.msra.mxu0 0.0
    %596 = vmatprep.subr.mxu0 0.0
    %597 = vmatpush1.msra.mxu0 0.0
    %598 = vmatprep.subr.mxu0 0.0
    %599 = vmatpush1.msra.mxu0 0.0
    %600 = vmatprep.subr.mxu0 0.0
    %601 = vmatpush1.msra.mxu0 0.0
    %602 = vmatprep.subr.mxu0 0.0
    %603 = vmatpush1.msra.mxu0 0.0
    %604 = vmatprep.subr.mxu0 0.0
    %605 = vmatpush1.msra.mxu0 0.0
    %606 = vmatprep.subr.mxu0 0.0
    %607 = vmatpush1.msra.mxu0 0.0
    %608 = vmatprep.subr.mxu0 0.0
    %609 = vmatpush1.msra.mxu0 0.0
    %610 = vmatprep.subr.mxu0 0.0
    %611 = vmatpush1.msra.mxu0 0.0
    %612 = vmatprep.subr.mxu0 0.0
    %613 = vmatpush1.msra.mxu0 0.0
    %614 = vmatprep.subr.mxu0 0.0
    %615 = vmatpush1.msra.mxu0 0.0
    %616 = vmatprep.subr.mxu0 0.0
    %617 = vmatpush1.msra.mxu0 0.0
    %618 = vmatprep.subr.mxu0 0.0
    %619 = vmatpush1.msra.mxu0 0.0
    %620 = vmatprep.subr.mxu0 0.0
    %621 = vmatpush1.msra.mxu0 0.0
    %622 = vmatprep.subr.mxu0 0.0
    %623 = vmatpush1.msra.mxu0 0.0
    %624 = vmatprep.subr.mxu0 0.0
    %625 = vmatpush1.msra.mxu0 0.0
    %626 = vmatprep.subr.mxu0 0.0
    %627 = vmatpush1.msra.mxu0 0.0
    %628 = vmatprep.subr.mxu0 0.0
    %629 = vmatpush1.msra.mxu0 0.0
    %630 = vmatprep.subr.mxu0 0.0
    %631 = vmatpush1.msra.mxu0 0.0
    %632 = vmatprep.subr.mxu0 0.0
    %633 = vmatpush1.msra.mxu0 0.0
    %634 = vmatprep.subr.mxu0 0.0
    %635 = vmatpush1.msra.mxu0 0.0
    %636 = vmatprep.subr.mxu0 0.0
    %637 = vmatpush1.msra.mxu0 0.0
    %638 = vmatprep.subr.mxu0 0.0
    %639 = vmatpush1.msra.mxu0 0.0
    %640 = vmatprep.mubr.f32.mxu0 0.0
    %641 = vmatmul.mubr.f32.gmra.mrb[0].mxu0 %v574
    %v642 = vpop.f32.mrb[0].mxu0
    %v643 = vadd.f32 %v540, %v642
    %v644 = vpop.f32.mrb[0].mxu0
    %v645 = vadd.f32 %v544, %v644
    %646 = vdwg.mxu0
    %647 = vmatprep.subr.mxu0 %v510
    %648 = vmatpush1.msra.mxu0 %v509
    %649 = vmatprep.subr.mxu0 %v517
    %650 = vmatpush1.msra.mxu0 %v516
    %651 = vmatprep.subr.mxu0 %v524
    %652 = vmatpush1.msra.mxu0 %v523
    %653 = vmatprep.subr.mxu0 %v531
    %654 = vmatpush1.msra.mxu0 %v530
    %655 = vmatprep.subr.mxu0 0.0
    %656 = vmatpush1.msra.mxu0 0.0
    %657 = vmatprep.subr.mxu0 0.0
    %658 = vmatpush1.msra.mxu0 0.0
    %659 = vmatprep.subr.mxu0 0.0
    %660 = vmatpush1.msra.mxu0 0.0
    %661 = vmatprep.subr.mxu0 0.0
    %662 = vmatpush1.msra.mxu0 0.0
    %663 = vmatprep.subr.mxu0 0.0
    %664 = vmatpush1.msra.mxu0 0.0
    %665 = vmatprep.subr.mxu0 0.0
    %666 = vmatpush1.msra.mxu0 0.0
    %667 = vmatprep.subr.mxu0 0.0
    %668 = vmatpush1.msra.mxu0 0.0
    %669 = vmatprep.subr.mxu0 0.0
    %670 = vmatpush1.msra.mxu0 0.0
    %671 = vmatprep.subr.mxu0 0.0
    %672 = vmatpush1.msra.mxu0 0.0
    %673 = vmatprep.subr.mxu0 0.0
    %674 = vmatpush1.msra.mxu0 0.0
    %675 = vmatprep.subr.mxu0 0.0
    %676 = vmatpush1.msra.mxu0 0.0
    %677 = vmatprep.subr.mxu0 0.0
    %678 = vmatpush1.msra.mxu0 0.0
    %679 = vmatprep.subr.mxu0 0.0
    %680 = vmatpush1.msra.mxu0 0.0
    %681 = vmatprep.subr.mxu0 0.0
    %682 = vmatpush1.msra.mxu0 0.0
    %683 = vmatprep.subr.mxu0 0.0
    %684 = vmatpush1.msra.mxu0 0.0
    %685 = vmatprep.subr.mxu0 0.0
    %686 = vmatpush1.msra.mxu0 0.0
    %687 = vmatprep.subr.mxu0 0.0
    %688 = vmatpush1.msra.mxu0 0.0
    %689 = vmatprep.subr.mxu0 0.0
    %690 = vmatpush1.msra.mxu0 0.0
    %691 = vmatprep.subr.mxu0 0.0
    %692 = vmatpush1.msra.mxu0 0.0
    %693 = vmatprep.subr.mxu0 0.0
    %694 = vmatpush1.msra.mxu0 0.0
    %695 = vmatprep.subr.mxu0 0.0
    %696 = vmatpush1.msra.mxu0 0.0
    %697 = vmatprep.subr.mxu0 0.0
    %698 = vmatpush1.msra.mxu0 0.0
    %699 = vmatprep.subr.mxu0 0.0
    %700 = vmatpush1.msra.mxu0 0.0
    %701 = vmatprep.subr.mxu0 0.0
    %702 = vmatpush1.msra.mxu0 0.0
    %703 = vmatprep.subr.mxu0 0.0
    %704 = vmatpush1.msra.mxu0 0.0
    %705 = vmatprep.subr.mxu0 0.0
    %706 = vmatpush1.msra.mxu0 0.0
    %707 = vmatprep.subr.mxu0 0.0
    %708 = vmatpush1.msra.mxu0 0.0
    %709 = vmatprep.subr.mxu0 0.0
    %710 = vmatpush1.msra.mxu0 0.0
    %711 = vmatprep.mubr.f32.mxu0 0.0
    %712 = vmatmul.mubr.f32.gmra.mrb[0].mxu0 %v574
    %v713 = vpop.f32.mrb[0].mxu0
    %v714 = vadd.f32 %v548, %v713
    %v715 = vpop.f32.mrb[0].mxu0
    %v716 = vadd.f32 %v552, %v715
    %717 = vdwg.mxu0
    %718 = vmatprep.subr.mxu0 %v512
    %719 = vmatpush1.msra.mxu0 %v511
    %720 = vmatprep.subr.mxu0 %v519
    %721 = vmatpush1.msra.mxu0 %v518
    %722 = vmatprep.subr.mxu0 %v526
    %723 = vmatpush1.msra.mxu0 %v525
    %724 = vmatprep.subr.mxu0 %v533
    %725 = vmatpush1.msra.mxu0 %v532
    %726 = vmatprep.subr.mxu0 0.0
    %727 = vmatpush1.msra.mxu0 0.0
    %728 = vmatprep.subr.mxu0 0.0
    %729 = vmatpush1.msra.mxu0 0.0
    %730 = vmatprep.subr.mxu0 0.0
    %731 = vmatpush1.msra.mxu0 0.0
    %732 = vmatprep.subr.mxu0 0.0
    %733 = vmatpush1.msra.mxu0 0.0
    %734 = vmatprep.subr.mxu0 0.0
    %735 = vmatpush1.msra.mxu0 0.0
    %736 = vmatprep.subr.mxu0 0.0
    %737 = vmatpush1.msra.mxu0 0.0
    %738 = vmatprep.subr.mxu0 0.0
    %739 = vmatpush1.msra.mxu0 0.0
    %740 = vmatprep.subr.mxu0 0.0
    %741 = vmatpush1.msra.mxu0 0.0
    %742 = vmatprep.subr.mxu0 0.0
    %743 = vmatpush1.msra.mxu0 0.0
    %744 = vmatprep.subr.mxu0 0.0
    %745 = vmatpush1.msra.mxu0 0.0
    %746 = vmatprep.subr.mxu0 0.0
    %747 = vmatpush1.msra.mxu0 0.0
    %748 = vmatprep.subr.mxu0 0.0
    %749 = vmatpush1.msra.mxu0 0.0
    %750 = vmatprep.subr.mxu0 0.0
    %751 = vmatpush1.msra.mxu0 0.0
    %752 = vmatprep.subr.mxu0 0.0
    %753 = vmatpush1.msra.mxu0 0.0
    %754 = vmatprep.subr.mxu0 0.0
    %755 = vmatpush1.msra.mxu0 0.0
    %756 = vmatprep.subr.mxu0 0.0
    %757 = vmatpush1.msra.mxu0 0.0
    %758 = vmatprep.subr.mxu0 0.0
    %759 = vmatpush1.msra.mxu0 0.0
    %760 = vmatprep.subr.mxu0 0.0
    %761 = vmatpush1.msra.mxu0 0.0
    %762 = vmatprep.subr.mxu0 0.0
    %763 = vmatpush1.msra.mxu0 0.0
    %764 = vmatprep.subr.mxu0 0.0
    %765 = vmatpush1.msra.mxu0 0.0
    %766 = vmatprep.subr.mxu0 0.0
    %767 = vmatpush1.msra.mxu0 0.0
    %768 = vmatprep.subr.mxu0 0.0
    %769 = vmatpush1.msra.mxu0 0.0
    %770 = vmatprep.subr.mxu0 0.0
    %771 = vmatpush1.msra.mxu0 0.0
    %772 = vmatprep.subr.mxu0 0.0
    %773 = vmatpush1.msra.mxu0 0.0
    %774 = vmatprep.subr.mxu0 0.0
    %775 = vmatpush1.msra.mxu0 0.0
    %776 = vmatprep.subr.mxu0 0.0
    %777 = vmatpush1.msra.mxu0 0.0
    %778 = vmatprep.subr.mxu0 0.0
    %779 = vmatpush1.msra.mxu0 0.0
    %780 = vmatprep.subr.mxu0 0.0
    %781 = vmatpush1.msra.mxu0 0.0
    %782 = vmatprep.mubr.f32.mxu0 0.0
    %783 = vmatmul.mubr.f32.gmra.mrb[0].mxu0 %v574
    %v784 = vpop.f32.mrb[0].mxu0
    %v785 = vadd.f32 %v556, %v784
    %v786 = vpop.f32.mrb[0].mxu0
    %v787 = vadd.f32 %v560, %v786
    %788 = vdwg.mxu0
    %789 = vmatprep.subr.mxu0 0.0
    %790 = vmatpush1.msra.mxu0 %v513
    %791 = vmatprep.subr.mxu0 0.0
    %792 = vmatpush1.msra.mxu0 %v520
    %793 = vmatprep.subr.mxu0 0.0
    %794 = vmatpush1.msra.mxu0 %v527
    %795 = vmatprep.subr.mxu0 0.0
    %796 = vmatpush1.msra.mxu0 %v534
    %797 = vmatprep.subr.mxu0 0.0
    %798 = vmatpush1.msra.mxu0 0.0
    %799 = vmatprep.subr.mxu0 0.0
    %800 = vmatpush1.msra.mxu0 0.0
    %801 = vmatprep.subr.mxu0 0.0
    %802 = vmatpush1.msra.mxu0 0.0
    %803 = vmatprep.subr.mxu0 0.0
    %804 = vmatpush1.msra.mxu0 0.0
    %805 = vmatprep.subr.mxu0 0.0
    %806 = vmatpush1.msra.mxu0 0.0
    %807 = vmatprep.subr.mxu0 0.0
    %808 = vmatpush1.msra.mxu0 0.0
    %809 = vmatprep.subr.mxu0 0.0
    %810 = vmatpush1.msra.mxu0 0.0
    %811 = vmatprep.subr.mxu0 0.0
    %812 = vmatpush1.msra.mxu0 0.0
    %813 = vmatprep.subr.mxu0 0.0
    %814 = vmatpush1.msra.mxu0 0.0
    %815 = vmatprep.subr.mxu0 0.0
    %816 = vmatpush1.msra.mxu0 0.0
    %817 = vmatprep.subr.mxu0 0.0
    %818 = vmatpush1.msra.mxu0 0.0
    %819 = vmatprep.subr.mxu0 0.0
    %820 = vmatpush1.msra.mxu0 0.0
    %821 = vmatprep.subr.mxu0 0.0
    %822 = vmatpush1.msra.mxu0 0.0
    %823 = vmatprep.subr.mxu0 0.0
    %824 = vmatpush1.msra.mxu0 0.0
    %825 = vmatprep.subr.mxu0 0.0
    %826 = vmatpush1.msra.mxu0 0.0
    %827 = vmatprep.subr.mxu0 0.0
    %828 = vmatpush1.msra.mxu0 0.0
    %829 = vmatprep.subr.mxu0 0.0
    %830 = vmatpush1.msra.mxu0 0.0
    %831 = vmatprep.subr.mxu0 0.0
    %832 = vmatpush1.msra.mxu0 0.0
    %833 = vmatprep.subr.mxu0 0.0
    %834 = vmatpush1.msra.mxu0 0.0
    %835 = vmatprep.subr.mxu0 0.0
    %836 = vmatpush1.msra.mxu0 0.0
    %837 = vmatprep.subr.mxu0 0.0
    %838 = vmatpush1.msra.mxu0 0.0
    %839 = vmatprep.subr.mxu0 0.0
    %840 = vmatpush1.msra.mxu0 0.0
    %841 = vmatprep.subr.mxu0 0.0
    %842 = vmatpush1.msra.mxu0 0.0
    %843 = vmatprep.subr.mxu0 0.0
    %844 = vmatpush1.msra.mxu0 0.0
    %845 = vmatprep.subr.mxu0 0.0
    %846 = vmatpush1.msra.mxu0 0.0
    %847 = vmatprep.subr.mxu0 0.0
    %848 = vmatpush1.msra.mxu0 0.0
    %849 = vmatprep.subr.mxu0 0.0
    %850 = vmatpush1.msra.mxu0 0.0
    %851 = vmatprep.subr.mxu0 0.0
    %852 = vmatpush1.msra.mxu0 0.0
    %853 = vmatprep.mubr.f32.mxu0 0.0
    %854 = vmatmul.mubr.f32.gmra.mrb[0].mxu0 %v574
    %v855 = vpop.f32.mrb[0].mxu0
    %v856 = vadd.f32 %v564, %v855
    %v857 = vpop.f32.mrb[0].mxu0
    %858 = vdwg.mxu0
    %v859 = vsub.f32 0.0, %v643
    %v860 = vsub.f32 0.0, %v645
    %v861 = vsub.f32 0.0, %v714
    %v862 = vsub.f32 0.0, %v716
    %v863 = vsub.f32 0.0, %v785
    %v864 = vsub.f32 0.0, %v787
    %v865 = vsub.f32 0.0, %v856
    %v866 = vmul.f32 %v859, 1.442695
    %v867 = vpow.pop %v866
    %v868 = vmul.f32 %v860, 1.442695
    %v869 = vpow.pop %v868
    %v870 = vmul.f32 %v861, 1.442695
    %v871 = vpow.pop %v870
    %v872 = vmul.f32 %v862, 1.442695
    %v873 = vpow.pop %v872
    %v874 = vmul.f32 %v863, 1.442695
    %v875 = vpow.pop %v874
    %v876 = vmul.f32 %v864, 1.442695
    %v877 = vpow.pop %v876
    %v878 = vmul.f32 %v865, 1.442695
    %v879 = vpow.pop %v878
    %v880 = vadd.f32 %v867, 1.0
    %v881 = vadd.f32 %v869, 1.0
    %v882 = vadd.f32 %v871, 1.0
    %v883 = vadd.f32 %v873, 1.0
    %v884 = vadd.f32 %v875, 1.0
    %v885 = vadd.f32 %v877, 1.0
    %v886 = vadd.f32 %v879, 1.0
    %v887 = vrcp.pop %v880
    %v888 = vmul.f32 1.0, %v887
    %v889 = vrcp.pop %v881
    %v890 = vmul.f32 1.0, %v889
    %v891 = vrcp.pop %v882
    %v892 = vmul.f32 1.0, %v891
    %v893 = vrcp.pop %v883
    %v894 = vmul.f32 1.0, %v893
    %v895 = vrcp.pop %v884
    %v896 = vmul.f32 1.0, %v895
    %v897 = vrcp.pop %v885
    %v898 = vmul.f32 1.0, %v897
    %v899 = vrcp.pop %v886
    %v900 = vmul.f32 1.0, %v899
    %v901 = vpack.c.bf16 %v888, %v888
    %v902 = vpack.c.bf16 %v890, %v890
    %v903 = vpack.c.bf16 %v892, %v892
    %v904 = vpack.c.bf16 %v894, %v894
    %v905 = vpack.c.bf16 %v896, %v896
    %v906 = vpack.c.bf16 %v898, %v898
    %v907 = vpack.c.bf16 %v900, %v900
    %v915 = vcombine.low %v901, %v902
    %v916 = vcombine.low %v903, %v904
    %v917 = vcombine.low %v905, %v906
    %v919 = vunpack.c.l.s4 1966171168
    %v920 = vunpack.c.0.s8 %v919
    %v921 = vlaneseq
    %v922 = vshrl.u32 %v921, 7
    %v923 = vsub.s32 %v920, %v922
    %v924 = vrot.slane %v915, %v923
    %v926 = vunpack.c.l.s4 1966171168
    %v927 = vunpack.c.0.s8 %v926
    %v928 = vlaneseq
    %v929 = vshrl.u32 %v928, 7
    %v930 = vsub.s32 %v927, %v929
    %v931 = vrot.slane %v916, %v930
    %v933 = vunpack.c.l.s4 1966171168
    %v934 = vunpack.c.0.s8 %v933
    %v935 = vlaneseq
    %v936 = vshrl.u32 %v935, 7
    %v937 = vsub.s32 %v934, %v936
    %v938 = vrot.slane %v917, %v937
    %v940 = vunpack.c.l.s4 1966171168
    %v941 = vunpack.c.0.s8 %v940
    %v942 = vlaneseq
    %v943 = vshrl.u32 %v942, 7
    %v944 = vsub.s32 %v941, %v943
    %v945 = vrot.slane %v907, %v944
    %v946 = vcombine.low %v924, %v931
    %v947 = vcombine.high %v924, %v931
    %v948 = vcombine.low %v938, %v945
    %v949 = vcombine.high %v938, %v945
    %v951 = vunpack.c.l.s4 1966171168
    %v952 = vunpack.c.0.s8 %v951
    %v953 = vlaneseq
    %v954 = vshrl.u32 %v953, 7
    %v955 = vsub.s32 %v952, %v954
    %v956 = vrot.slane %v946, %v955
    %v958 = vunpack.c.l.s4 1966171168
    %v959 = vunpack.c.0.s8 %v958
    %v960 = vlaneseq
    %v961 = vshrl.u32 %v960, 7
    %v962 = vsub.s32 %v959, %v961
    %v963 = vrot.slane %v947, %v962
    %v965 = vunpack.c.l.s4 1966171168
    %v966 = vunpack.c.0.s8 %v965
    %v967 = vlaneseq
    %v968 = vshrl.u32 %v967, 7
    %v969 = vsub.s32 %v966, %v968
    %v970 = vrot.slane %v948, %v969
    %v972 = vunpack.c.l.s4 1966171168
    %v973 = vunpack.c.0.s8 %v972
    %v974 = vlaneseq
    %v975 = vshrl.u32 %v974, 7
    %v976 = vsub.s32 %v973, %v975
    %v977 = vrot.slane %v949, %v976
    %v978 = vcombine.low %v956, %v970
    %v979 = vcombine.high %v956, %v970
    %v980 = vcombine.low %v963, %v977
    %v981 = vcombine.high %v963, %v977
    %vm986 = vcmask 1040384
    %vm987 = vcmask 1041409
    %vm988 = vmor %vm987, %vm986
    %vm989 = vcmask 1042434
    %vm990 = vmor %vm989, %vm988
    %vm991 = vcmask 1043459
    %vm992 = vmor %vm991, %vm990
    %vm993 = vcmask 1044484
    %vm994 = vmor %vm993, %vm992
    %vm995 = vcmask 1045509
    %vm996 = vmor %vm995, %vm994
    %vm997 = vcmask 129030
    %vm998 = vmor %vm997, %vm996
    %999 = vst.msk [vmem:[#allocation2] sm:$0x7f] %vm998, %v978
    %1000 = vst.msk [vmem:[#allocation2 + $0x7] sm:$0x7f] %vm998, %v980
    %1001 = vst.msk [vmem:[#allocation2 + $0xe] sm:$0x7f] %vm998, %v979
    %1002 = vst.msk [vmem:[#allocation2 + $0x15] sm:$0x7f] %vm998, %v981
    // Predicated region
    $region22: #{autoencoder_forward.1} parent=1 // pred_check
      _
    $region23: #{autoencoder_forward.1} parent=1 // pred_check_branch
      %1004 = sbr.rel (0) target = $region25
    $region24: #{autoencoder_forward.1} parent=1 // pred_region
      %s1006 = ssub.s32 448, 112
      %1007 = vsyncadd [#allocation3], %s1006
      %s1008 = sshll.u32 [#allocation2], 4
      %s1009 = int_to_ptr.vmem [resolvable:$true] %s1008
      %1014 = dma.vmem_to_hbm [thread:$0]  %s1009, 112, %s5, [#allocation3], 112, 112, 7
    $region25: #{autoencoder_forward.1} parent=1 // pred_fallthru
      _
    // Predicated region
    $region26: #{autoencoder_forward.1} parent=1 // pred_check
      _
    $region27: #{autoencoder_forward.1} parent=1 // pred_check_branch
      %1016 = sbr.rel (0) target = $region29
    $region28: #{autoencoder_forward.1} parent=1 // pred_region
      %1017 = dma.done [#allocation3], 448
    $region29: #{autoencoder_forward.1} parent=1 // pred_fallthru
      _
    %1018 = vsyncpa [#allocation3], 1

</llo_original>
